<compile_context>
chip_gen: v5e
topology: v5e:2x2
jax: 0.10.0
libtpu: 0.0.40
codegen_flags: <defaults>
</compile_context>

<pallas_src>
import functools

import jax
import jax.numpy as jnp
from jax import lax
from jax.experimental import pallas as pl
from jax.experimental.pallas import tpu as pltpu

# dot_general dims for contracting the LAST axis of both operands:
# (tq, d) x (tk, d) -> (tq, tk)  ==  '... i d, ... j d -> ... i j'.
_CONTRACT_LAST = (((1,), (1,)), ((), ()))


def _round_up(n, m):
    return ((n + m - 1) // m) * m


def _pick_tile(n, target, mult=128):
    """Largest multiple of `mult` that divides n and is <= target.

    n is always a multiple of `mult` here, so `mult` itself is a valid
    fallback (no full-extent cliff)."""
    best = mult
    t = mult
    limit = min(target, n)
    while t <= limit:
        if n % t == 0:
            best = t
        t += mult
    return min(best, n)


def _vmem_capacity_bytes(default=64 * 1024 * 1024):
    """Physical VMEM per TensorCore; conservative 64 MiB fallback."""
    try:
        info = pltpu.get_tpu_info()
        cap = getattr(info, "vmem_capacity_bytes", None)
        if cap:
            return int(cap)
    except Exception:
        pass
    return default


def _stage1_bytes(tp, dim_p):
    bf = 2
    return (2 * tp * dim_p * bf               # x tile (double-buffered)
            + 2 * dim_p * (2 * dim_p) * bf    # fused KV weight (double-buffered)
            + 2 * tp * (2 * dim_p) * bf)      # fused KV output tile


def _stage2_bytes(tq, tk, dim_p, out_bytes):
    bf = 2
    return (2 * tq * dim_p * bf               # x tile
            + 2 * 2 * dim_p * dim_p * bf      # wq^T + wf^T (double-buffered)
            + 2 * 2 * tk * dim_p * bf         # K + V tiles (double-buffered)
            + 2 * tq * dim_p * out_bytes      # output tile
            + tq * dim_p * bf                 # q scratch (bf16)
            + tq * dim_p * 4                  # f32 accumulator scratch
            + 2 * tq * 4                      # m / l scratch
            + 2 * tq * tk * 4)                # score / prob intermediates


def _kv_proj_kernel(x_ref, w_kv_ref, kv_ref):
    """Fused K/V projection: (tp, dim_p) @ (dim_p, 2*dim_p), one lane-dense store."""
    kv_ref[...] = jnp.dot(x_ref[...], w_kv_ref[...],
                          preferred_element_type=jnp.float32).astype(kv_ref.dtype)


def _attn_kernel(scale, seq_len, masked,
                 x_ref, wq_ref, k_ref, v_ref, wf_ref, o_ref,
                 q_sc, m_sc, l_sc, acc_sc):
    """Online-softmax attention with fused Q projection and fused final proj."""
    j = pl.program_id(1)

    @pl.when(j == 0)
    def _():
        # Q projection fused here: one (tq, dim_p) matmul per query tile;
        # scale folded into Q (O(tq*dim_p) multiplies, not O(tq*tk)).
        q = jnp.dot(x_ref[...], wq_ref[...], preferred_element_type=jnp.float32)
        q_sc[...] = (q * scale).astype(q_sc.dtype)
        m_sc[...] = jnp.full_like(m_sc, -jnp.inf)
        l_sc[...] = jnp.zeros_like(l_sc)
        acc_sc[...] = jnp.zeros_like(acc_sc)

    # energy tile = q @ k^T by contracting last dims (no explicit transpose).
    s = lax.dot_general(q_sc[...], k_ref[...], _CONTRACT_LAST,
                        preferred_element_type=jnp.float32)
    if masked:
        # seq was zero-padded up to a multiple of 128: mask padded keys out
        # of the softmax (padded queries are sliced away by the wrapper).
        tk = k_ref.shape[0]
        kpos = j * tk + lax.broadcasted_iota(jnp.int32, s.shape, 1)
        s = jnp.where(kpos < seq_len, s, jnp.float32(-1e30))

    m_prev = m_sc[...]
    m_new = jnp.maximum(m_prev, jnp.max(s, axis=-1, keepdims=True))
    alpha = jnp.exp(m_prev - m_new)
    p = jnp.exp(s - m_new)
    l_sc[...] = alpha * l_sc[...] + jnp.sum(p, axis=-1, keepdims=True)
    acc_sc[...] = alpha * acc_sc[...] + jnp.dot(
        p.astype(v_ref.dtype), v_ref[...], preferred_element_type=jnp.float32)
    m_sc[...] = m_new

    @pl.when(j == pl.num_programs(1) - 1)
    def _():
        # approx reciprocal: EUP slot, ~1e-3 rel error (fine at bf16 tolerance).
        attn = acc_sc[...] * pl.reciprocal(l_sc[...], approx=True)
        o_ref[...] = jnp.dot(attn.astype(wf_ref.dtype), wf_ref[...],
                             preferred_element_type=jnp.float32).astype(o_ref.dtype)


def multi_head_self_attention(x, w_key, w_query, w_value, w_final, heads=8,
                              compute_dtype=jnp.bfloat16,
                              q_tile_target=512, kv_tile_target=None):
    """x: (seq, dim).  w_*: (out, in) PyTorch-Linear layout (NOT transposed).

    TODO(synk): the `mask` argument of the PyTorch forward (masked_fill with
    -inf) is not implemented (mask=None path only).
    """
    seq, dim = x.shape
    head_dim = dim // heads
    scale = float(head_dim ** 0.5)      # module *multiplies* by sqrt(head_dim)
    out_dtype = x.dtype
    out_bytes = jnp.dtype(out_dtype).itemsize

    # ---- generation-aware VMEM budget -------------------------------------
    vmem_cap = _vmem_capacity_bytes()          # ~64 MiB v7x, ~128 MiB v5e/v6e
    vmem_limit = int(vmem_cap * 0.85)          # headroom for Mosaic scratch
    budget = int(vmem_limit * 0.8)
    if kv_tile_target is None:
        kv_tile_target = 2048 if vmem_cap >= (96 << 20) else 1024

    # ---- lane-dense padding (exact: zero pads) -----------------------------
    dim_p = max(128, _round_up(dim, 128))
    seq_p = max(128, _round_up(seq, 128))
    masked = seq_p != seq
    x_p = jnp.pad(x, ((0, seq_p - seq), (0, dim_p - dim)))
    padw = lambda w: jnp.pad(w, ((0, dim_p - dim), (0, dim_p - dim)))
    w_key, w_query, w_value, w_final = map(padw, (w_key, w_query, w_value, w_final))

    # Pre-transpose once (one-time XLA op) so in-kernel weight matmuls are
    # canonical (in, out) contractions -- no per-tile XLU-transpose risk on v5e.
    xc = x_p.astype(compute_dtype)
    w_kv_t = jnp.concatenate([w_key.T, w_value.T], axis=1).astype(compute_dtype)
    wq_t = w_query.T.astype(compute_dtype)
    wf_t = w_final.T.astype(compute_dtype)

    # ---------------- stage 1: fused K/V projection -------------------------
    tp = _pick_tile(seq_p, 512)
    if seq_p // tp < 2 and seq_p >= 512:
        tp = seq_p // 2                 # keep >= 2 blocks for v7x's 2 TensorCores
    while _stage1_bytes(tp, dim_p) > budget and tp > 128:
        tp = _pick_tile(seq_p, tp // 2)

    kv = pl.pallas_call(
        _kv_proj_kernel,
        out_shape=jax.ShapeDtypeStruct((seq_p, 2 * dim_p), compute_dtype),
        grid_spec=pltpu.PrefetchScalarGridSpec(
            num_scalar_prefetch=0, grid=(seq_p // tp,),
            in_specs=[pl.BlockSpec((tp, dim_p), lambda i: (i, 0)),
                      # TODO(synk): pipeline_mode=pl.Buffered(1) would halve the
                      # resident-weight footprint on v7x; left at the default
                      # to keep compilation portable across jax versions.
                      pl.BlockSpec((dim_p, 2 * dim_p), lambda i: (0, 0))],
            out_specs=pl.BlockSpec((tp, 2 * dim_p), lambda i: (i, 0))),
        compiler_params=pltpu.CompilerParams(
            dimension_semantics=("parallel",),
            vmem_limit_bytes=vmem_limit),
    )(xc, w_kv_t)

    # ------ stage 2: fused Q proj + flash attention + final projection ------
    tq = _pick_tile(seq_p, q_tile_target)
    if seq_p // tq < 2 and seq_p >= 512:
        tq = seq_p // 2                 # >= 2 query blocks for v7x megacore

    if _stage2_bytes(tq, seq_p, dim_p, out_bytes) <= budget:
        # Whole padded K/V fits: keep it VMEM-resident (fetched once, constant
        # block index) -- no K/V re-streaming per query tile.
        tk = seq_p
    else:
        tk = _pick_tile(seq_p, kv_tile_target)
        while _stage2_bytes(tq, tk, dim_p, out_bytes) > budget and tk > 128:
            tk = _pick_tile(seq_p, tk // 2)
        while _stage2_bytes(tq, tk, dim_p, out_bytes) > budget and tq > 128:
            tq = _pick_tile(seq_p, tq // 2)

    nq, nk = seq_p // tq, seq_p // tk
    kernel = functools.partial(_attn_kernel, scale, seq, masked)

    out_p = pl.pallas_call(
        kernel,
        out_shape=jax.ShapeDtypeStruct((seq_p, dim_p), out_dtype),
        grid_spec=pltpu.PrefetchScalarGridSpec(
            num_scalar_prefetch=0, grid=(nq, nk),
            in_specs=[pl.BlockSpec((tq, dim_p), lambda i, j: (i, 0)),      # x
                      pl.BlockSpec((dim_p, dim_p), lambda i, j: (0, 0)),   # wq^T
                      pl.BlockSpec((tk, dim_p), lambda i, j: (j, 0)),      # K cols of kv
                      pl.BlockSpec((tk, dim_p), lambda i, j: (j, 1)),      # V cols of kv
                      pl.BlockSpec((dim_p, dim_p), lambda i, j: (0, 0))],  # wf^T
            out_specs=pl.BlockSpec((tq, dim_p), lambda i, j: (i, 0)),
            scratch_shapes=[pltpu.VMEM((tq, dim_p), compute_dtype),   # q (scaled)
                            pltpu.VMEM((tq, 1), jnp.float32),         # running max
                            pltpu.VMEM((tq, 1), jnp.float32),         # running sum
                            pltpu.VMEM((tq, dim_p), jnp.float32)]),   # accumulator
        compiler_params=pltpu.CompilerParams(
            dimension_semantics=("parallel", "arbitrary"),
            vmem_limit_bytes=vmem_limit),
    )(xc, wq_t, kv, kv, wf_t)

    return out_p[:seq, :dim].astype(out_dtype)


def _reference(x, w_key, w_query, w_value, w_final, heads=8):
    """Pure-JAX f32 mirror of the PyTorch forward (mask=None)."""
    dim = x.shape[-1]
    head_dim = dim // heads
    scale = head_dim ** 0.5
    k = x @ w_key.T
    q = x @ w_query.T
    v = x @ w_value.T
    energy = jnp.einsum('id,jd->ij', q, k) * scale
    attn = jax.nn.softmax(energy, axis=1)    # nn.Softmax() -> dim=1 for 2-D input
    out = jnp.einsum('ij,jd->id', attn, v)
    return out @ w_final.T


if __name__ == "__main__":
    seq, dim, heads = 8, 32, 8
    key = jax.random.PRNGKey(0)
    kx, kk, kq, kv, kf = jax.random.split(key, 5)

    x = jax.random.normal(kx, (seq, dim), dtype=jnp.float32)
    # deterministic synthetic weights, PyTorch Linear layout (out, in)
    w_key = jax.random.normal(kk, (dim, dim), dtype=jnp.float32) * 0.1
    w_query = jax.random.normal(kq, (dim, dim), dtype=jnp.float32) * 0.1
    w_value = jax.random.normal(kv, (dim, dim), dtype=jnp.float32) * 0.1
    w_final = jax.random.normal(kf, (dim, dim), dtype=jnp.float32) * 0.1

    out = multi_head_self_attention(x, w_key, w_query, w_value, w_final, heads=heads)
    out = jax.block_until_ready(out)

    ref = _reference(x, w_key, w_query, w_value, w_final, heads=heads)
    assert out.shape == (seq, dim)
    # bf16 MXU inputs with f32 accumulation (+ approx reciprocal): compare
    # against the f32 reference with a bf16-appropriate tolerance.
    assert jnp.allclose(out, ref, atol=5e-2, rtol=5e-2), "mismatch vs reference"

    print("KERNEL_OK")
</pallas_src>

<mosaic_0001>
module attributes {stable_mosaic.version = 11 : i64} {
  func.func @_kv_proj_kernel(%arg0: i32, %arg1: memref<128x128xbf16, #tpu.memory_space<vmem>>, %arg2: memref<128x256xbf16, #tpu.memory_space<vmem>>, %arg3: memref<128x256xbf16, #tpu.memory_space<vmem>>) attributes {dimension_semantics = [#tpu.dimension_semantics<parallel>], iteration_bounds = array<i64: 1>, scalar_prefetch = 0 : i64, scratch_operands = 0 : i64, tpu.core_type = #tpu.core_type<tc>, window_params = [{transform_indices = @transform_0, window_bounds = array<i64: 128, 128>}, {pipeline_mode = #tpu.pipeline_mode<synchronous>, transform_indices = @transform_1, window_bounds = array<i64: 128, 256>}, {transform_indices = @transform_2, window_bounds = array<i64: 128, 256>}]} {
    %c0 = arith.constant 0 : index
    %c0_0 = arith.constant 0 : index
    %0 = vector.load %arg1[%c0, %c0_0] : memref<128x128xbf16, #tpu.memory_space<vmem>>, vector<128x128xbf16>
    %c0_1 = arith.constant 0 : index
    %c0_2 = arith.constant 0 : index
    %1 = vector.load %arg2[%c0_1, %c0_2] : memref<128x256xbf16, #tpu.memory_space<vmem>>, vector<128x256xbf16>
    %cst = arith.constant dense<0.000000e+00> : vector<128x256xf32>
    %2 = tpu.matmul %0, %1, %cst {dimension_numbers = #tpu.dot_dimension_numbers<[1], [0], [0], [1], [0, 0, 1, 1], [], []>} : vector<128x128xbf16>, vector<128x256xbf16>, vector<128x256xf32> -> vector<128x256xf32>
    %3 = arith.truncf %2 : vector<128x256xf32> to vector<128x256xbf16>
    %c0_3 = arith.constant 0 : index
    %c0_4 = arith.constant 0 : index
    %4 = vector.load %arg3[%c0_3, %c0_4] : memref<128x256xbf16, #tpu.memory_space<vmem>>, vector<128x256xbf16>
    tpu.vector_store %arg3[%c0_3, %c0_4], %3 {strides = array<i32>} : memref<128x256xbf16, #tpu.memory_space<vmem>>, vector<128x256xbf16>,
    return
  }
  func.func @transform_0(%arg0: i32) -> (i32, i32) {
    %c0_i32 = arith.constant 0 : i32
    %c0_i32_0 = arith.constant 0 : i32
    return %arg0, %c0_i32 : i32, i32
  }
  func.func @transform_1(%arg0: i32) -> (i32, i32) {
    %c0_i32 = arith.constant 0 : i32
    %c0_i32_0 = arith.constant 0 : i32
    %c0_i32_1 = arith.constant 0 : i32
    return %c0_i32, %c0_i32_0 : i32, i32
  }
  func.func @transform_2(%arg0: i32) -> (i32, i32) {
    %c0_i32 = arith.constant 0 : i32
    %c0_i32_0 = arith.constant 0 : i32
    return %arg0, %c0_i32 : i32, i32
  }
}

</mosaic_0001>

<llo_original>
// kernel: tpu_custom_call.1
$region0: #{tpu_custom_call.1}
  #allocation0 [shape = 'u32[]', space=smem, size = 0x4, offset = 0x4, fixed_abs, tag = 'smem constant byte address 0x4 - core index']
  #allocation1 [shape = 'u32[72,128]{1,0:T(1,128)}', space=vmem, size = 0x9000, scoped, tag = 'internal scratch']
  %s0 = inlined_call_operand.hbm [shape: bf16[128,128], index: 0, kind: input, shape index: {}]
  %s1 = inlined_call_operand.hbm [shape: bf16[128,256], index: 1, kind: input, shape index: {}]
  %s2 = inlined_call_operand.hbm [shape: bf16[128,256], index: 2, kind: output, shape index: {}]
  %s3 = sld [smem:[#allocation0]]
  $region26: #{tpu_custom_call.1} parent=0
    _
  %s5 = ssub.s32 1, %s3
  %s6 = scalar_select 0, %s5, %s3
  $region1: #{tpu_custom_call.1} parent=0
    #allocation2 [shape = 'u8[32768]{0}', space=vmem, size = 0x8000, scoped, tag = 'input window, operand 0, single buffered']
    #allocation3 [shape = 's32[1]{0}', space=sflag, size = 0x4, scoped, tag = 'scoped memory for tpu_custom_call.1']
    #allocation4 [shape = 's32[1]{0}', space=sflag, size = 0x4, scoped, tag = 'scoped memory for tpu_custom_call.1']
    #allocation5 [shape = 'u8[65536]{0}', space=vmem, size = 0x10000, scoped, tag = 'input window, operand 1, single buffered']
    #allocation6 [shape = 's32[1]{0}', space=sflag, size = 0x4, scoped, tag = 'scoped memory for tpu_custom_call.1']
    #allocation7 [shape = 'u8[65536]{0}', space=vmem, size = 0x10000, scoped, tag = 'output window, operand 0, single buffered']
    %7 = vsyncpa [#allocation3], 0
    %8 = vsyncpa [#allocation6], 0
    %9 = vsyncpa [#allocation4], 0
    // Predicated region
    $region2: #{tpu_custom_call.1} parent=1 // pred_check
      _
    $region3: #{tpu_custom_call.1} parent=1 // pred_check_branch
      %11 = sbr.rel (0) target = $region5
    $region4: #{tpu_custom_call.1} parent=1 // pred_region
      %13 = vsyncadd [#allocation3], 0
      %s14 = sshll.u32 %s0, 4
      %s15 = int_to_ptr.hbm [resolvable:$true] %s14
      %s16 = sshll.u32 [#allocation2], 4
      %s17 = int_to_ptr.vmem [resolvable:$true] %s16
      %22 = dma.hbm_to_vmem [thread:$0]  %s15, 1024, %s17, [#allocation3], 64, 64, 4
    $region5: #{tpu_custom_call.1} parent=1 // pred_fallthru
      _
    // Predicated region
    $region6: #{tpu_custom_call.1} parent=1 // pred_check
      _
    $region7: #{tpu_custom_call.1} parent=1 // pred_check_branch
      %24 = sbr.rel (0) target = $region9
    $region8: #{tpu_custom_call.1} parent=1 // pred_region
      %26 = vsyncadd [#allocation6], 0
      %s27 = sshll.u32 %s1, 4
      %s28 = int_to_ptr.hbm [resolvable:$true] %s27
      %s29 = sshll.u32 [#allocation5], 4
      %s30 = int_to_ptr.vmem [resolvable:$true] %s29
      %35 = dma.hbm_to_vmem [thread:$0]  %s28, 2048, %s30, [#allocation6], 128, 128, 8
    $region9: #{tpu_custom_call.1} parent=1 // pred_fallthru
      _
    // Predicated region
    $region10: #{tpu_custom_call.1} parent=1 // pred_check
      _
    $region11: #{tpu_custom_call.1} parent=1 // pred_check_branch
      %37 = sbr.rel (0) target = $region13
    $region12: #{tpu_custom_call.1} parent=1 // pred_region
      %39 = dma.done [#allocation3], 1024
    $region13: #{tpu_custom_call.1} parent=1 // pred_fallthru
      _
    // Predicated region
    $region14: #{tpu_custom_call.1} parent=1 // pred_check
      _
    $region15: #{tpu_custom_call.1} parent=1 // pred_check_branch
      %41 = sbr.rel (0) target = $region17
    $region16: #{tpu_custom_call.1} parent=1 // pred_region
      %43 = dma.done [#allocation6], 2048
    $region17: #{tpu_custom_call.1} parent=1 // pred_fallthru
      _
    %v44 = vld [vmem:[#allocation2] sm:$0xf]
    %v45 = vld [vmem:[#allocation2 + $0x4] sm:$0xf]
    %v46 = vld [vmem:[#allocation2 + $0x8] sm:$0xf]
    %v47 = vld [vmem:[#allocation2 + $0xc] sm:$0xf]
    %v48 = vld [vmem:[#allocation2 + $0x10] sm:$0xf]
    %v49 = vld [vmem:[#allocation2 + $0x14] sm:$0xf]
    %v50 = vld [vmem:[#allocation2 + $0x18] sm:$0xf]
    %v51 = vld [vmem:[#allocation2 + $0x1c] sm:$0xf]
    %v52 = vld [vmem:[#allocation2 + $0x20] sm:$0xf]
    %v53 = vld [vmem:[#allocation2 + $0x24] sm:$0xf]
    %v54 = vld [vmem:[#allocation2 + $0x28] sm:$0xf]
    %v55 = vld [vmem:[#allocation2 + $0x2c] sm:$0xf]
    %v56 = vld [vmem:[#allocation2 + $0x30] sm:$0xf]
    %v57 = vld [vmem:[#allocation2 + $0x34] sm:$0xf]
    %v58 = vld [vmem:[#allocation2 + $0x38] sm:$0xf]
    %v59 = vld [vmem:[#allocation2 + $0x3c] sm:$0xf]
    %v60 = vld [vmem:[#allocation5] sm:$0xff]
    %v61 = vld [vmem:[#allocation5 + $0x8] sm:$0xff]
    %v62 = vld [vmem:[#allocation5 + $0x10] sm:$0xff]
    %v63 = vld [vmem:[#allocation5 + $0x18] sm:$0xff]
    %v64 = vld [vmem:[#allocation5 + $0x20] sm:$0xff]
    %v65 = vld [vmem:[#allocation5 + $0x28] sm:$0xff]
    %v66 = vld [vmem:[#allocation5 + $0x30] sm:$0xff]
    %v67 = vld [vmem:[#allocation5 + $0x38] sm:$0xff]
    %v68 = vld [vmem:[#allocation5 + $0x40] sm:$0xff]
    %v69 = vld [vmem:[#allocation5 + $0x48] sm:$0xff]
    %v70 = vld [vmem:[#allocation5 + $0x50] sm:$0xff]
    %v71 = vld [vmem:[#allocation5 + $0x58] sm:$0xff]
    %v72 = vld [vmem:[#allocation5 + $0x60] sm:$0xff]
    %v73 = vld [vmem:[#allocation5 + $0x68] sm:$0xff]
    %v74 = vld [vmem:[#allocation5 + $0x70] sm:$0xff]
    %v75 = vld [vmem:[#allocation5 + $0x78] sm:$0xff]
    %v92 = vunpack.c.l.b16 %v44
    %v93 = vunpack.c.l.b16 %v45
    %v94 = vunpack.c.l.b16 %v46
    %v95 = vunpack.c.l.b16 %v47
    %v96 = vunpack.c.l.b16 %v48
    %v97 = vunpack.c.l.b16 %v49
    %v98 = vunpack.c.l.b16 %v50
    %v99 = vunpack.c.l.b16 %v51
    %v100 = vunpack.c.l.b16 %v52
    %v101 = vunpack.c.l.b16 %v53
    %v102 = vunpack.c.l.b16 %v54
    %v103 = vunpack.c.l.b16 %v55
    %v104 = vunpack.c.l.b16 %v56
    %v105 = vunpack.c.l.b16 %v57
    %v106 = vunpack.c.l.b16 %v58
    %v107 = vunpack.c.l.b16 %v59
    %v108 = vpack.c.b16 %v93, %v92
    %v109 = vpack.c.b16 %v95, %v94
    %v110 = vpack.c.b16 %v97, %v96
    %v111 = vpack.c.b16 %v99, %v98
    %v112 = vpack.c.b16 %v101, %v100
    %v113 = vpack.c.b16 %v103, %v102
    %v114 = vpack.c.b16 %v105, %v104
    %v115 = vpack.c.b16 %v107, %v106
    %v140 = vunpack.c.l.b16 %v60
    %v141 = vunpack.c.h.b16 %v60
    %v142 = vunpack.c.l.b16 %v61
    %v143 = vunpack.c.h.b16 %v61
    %v144 = vunpack.c.l.b16 %v62
    %v145 = vunpack.c.h.b16 %v62
    %v146 = vunpack.c.l.b16 %v63
    %v147 = vunpack.c.h.b16 %v63
    %v148 = vunpack.c.l.b16 %v64
    %v149 = vunpack.c.h.b16 %v64
    %v150 = vunpack.c.l.b16 %v65
    %v151 = vunpack.c.h.b16 %v65
    %v152 = vunpack.c.l.b16 %v66
    %v153 = vunpack.c.h.b16 %v66
    %v154 = vunpack.c.l.b16 %v67
    %v155 = vunpack.c.h.b16 %v67
    %v156 = vunpack.c.l.b16 %v68
    %v157 = vunpack.c.h.b16 %v68
    %v158 = vunpack.c.l.b16 %v69
    %v159 = vunpack.c.h.b16 %v69
    %v160 = vunpack.c.l.b16 %v70
    %v161 = vunpack.c.h.b16 %v70
    %v162 = vunpack.c.l.b16 %v71
    %v163 = vunpack.c.h.b16 %v71
    %v164 = vunpack.c.l.b16 %v72
    %v165 = vunpack.c.h.b16 %v72
    %v166 = vunpack.c.l.b16 %v73
    %v167 = vunpack.c.h.b16 %v73
    %v168 = vunpack.c.l.b16 %v74
    %v169 = vunpack.c.h.b16 %v74
    %v170 = vunpack.c.l.b16 %v75
    %v171 = vunpack.c.h.b16 %v75
    %v172 = vpack.c.b16 %v142, %v140
    %v173 = vpack.c.b16 %v143, %v141
    %v174 = vpack.c.b16 %v146, %v144
    %v175 = vpack.c.b16 %v147, %v145
    %v176 = vpack.c.b16 %v150, %v148
    %v177 = vpack.c.b16 %v151, %v149
    %v178 = vpack.c.b16 %v154, %v152
    %v179 = vpack.c.b16 %v155, %v153
    %v180 = vpack.c.b16 %v158, %v156
    %v181 = vpack.c.b16 %v159, %v157
    %v182 = vpack.c.b16 %v162, %v160
    %v183 = vpack.c.b16 %v163, %v161
    %v184 = vpack.c.b16 %v166, %v164
    %v185 = vpack.c.b16 %v167, %v165
    %v186 = vpack.c.b16 %v170, %v168
    %v187 = vpack.c.b16 %v171, %v169
    %204 = vmatpush.bf16.msra.mxu0 %v186
    %205 = vmatpush.bf16.msra.mxu0 %v184
    %206 = vmatpush.bf16.msra.mxu0 %v182
    %207 = vmatpush.bf16.msra.mxu0 %v180
    %208 = vmatpush.bf16.msra.mxu0 %v178
    %209 = vmatpush.bf16.msra.mxu0 %v176
    %210 = vmatpush.bf16.msra.mxu0 %v174
    %211 = vmatpush.bf16.msra.mxu0 %v172
    %212 = vmatmul.bf16.gmra.mxu0 %v108
    %v213 = vpop.f32.mrf.mxu0
    %v214 = vadd.f32 0.0, %v213
    %v215 = vpop.f32.mrf.mxu0
    %v216 = vadd.f32 0.0, %v215
    %217 = vmatmul.bf16.gmra.mxu0 %v109
    %v218 = vpop.f32.mrf.mxu0
    %v219 = vadd.f32 0.0, %v218
    %v220 = vpop.f32.mrf.mxu0
    %v221 = vadd.f32 0.0, %v220
    %222 = vmatmul.bf16.gmra.mxu0 %v110
    %v223 = vpop.f32.mrf.mxu0
    %v224 = vadd.f32 0.0, %v223
    %v225 = vpop.f32.mrf.mxu0
    %v226 = vadd.f32 0.0, %v225
    %227 = vmatmul.bf16.gmra.mxu0 %v111
    %v228 = vpop.f32.mrf.mxu0
    %v229 = vadd.f32 0.0, %v228
    %v230 = vpop.f32.mrf.mxu0
    %v231 = vadd.f32 0.0, %v230
    %232 = vmatmul.bf16.gmra.mxu0 %v112
    %v233 = vpop.f32.mrf.mxu0
    %v234 = vadd.f32 0.0, %v233
    %v235 = vpop.f32.mrf.mxu0
    %v236 = vadd.f32 0.0, %v235
    %237 = vmatmul.bf16.gmra.mxu0 %v113
    %v238 = vpop.f32.mrf.mxu0
    %v239 = vadd.f32 0.0, %v238
    %v240 = vpop.f32.mrf.mxu0
    %v241 = vadd.f32 0.0, %v240
    %242 = vmatmul.bf16.gmra.mxu0 %v114
    %v243 = vpop.f32.mrf.mxu0
    %v244 = vadd.f32 0.0, %v243
    %v245 = vpop.f32.mrf.mxu0
    %v246 = vadd.f32 0.0, %v245
    %247 = vmatmul.bf16.gmra.mxu0 %v115
    %v248 = vpop.f32.mrf.mxu0
    %v249 = vadd.f32 0.0, %v248
    %v250 = vpop.f32.mrf.mxu0
    %v251 = vadd.f32 0.0, %v250
    %252 = vdwg.mxu0
    %253 = vmatpush.bf16.msra.mxu0 %v187
    %254 = vmatpush.bf16.msra.mxu0 %v185
    %255 = vmatpush.bf16.msra.mxu0 %v183
    %256 = vmatpush.bf16.msra.mxu0 %v181
    %257 = vmatpush.bf16.msra.mxu0 %v179
    %258 = vmatpush.bf16.msra.mxu0 %v177
    %259 = vmatpush.bf16.msra.mxu0 %v175
    %260 = vmatpush.bf16.msra.mxu0 %v173
    %261 = vmatmul.bf16.gmra.mxu0 %v108
    %v262 = vpop.f32.mrf.mxu0
    %v263 = vadd.f32 0.0, %v262
    %v264 = vpop.f32.mrf.mxu0
    %v265 = vadd.f32 0.0, %v264
    %266 = vmatmul.bf16.gmra.mxu0 %v109
    %v267 = vpop.f32.mrf.mxu0
    %v268 = vadd.f32 0.0, %v267
    %v269 = vpop.f32.mrf.mxu0
    %v270 = vadd.f32 0.0, %v269
    %271 = vmatmul.bf16.gmra.mxu0 %v110
    %v272 = vpop.f32.mrf.mxu0
    %v273 = vadd.f32 0.0, %v272
    %v274 = vpop.f32.mrf.mxu0
    %v275 = vadd.f32 0.0, %v274
    %276 = vmatmul.bf16.gmra.mxu0 %v111
    %v277 = vpop.f32.mrf.mxu0
    %v278 = vadd.f32 0.0, %v277
    %v279 = vpop.f32.mrf.mxu0
    %v280 = vadd.f32 0.0, %v279
    %281 = vmatmul.bf16.gmra.mxu0 %v112
    %v282 = vpop.f32.mrf.mxu0
    %v283 = vadd.f32 0.0, %v282
    %v284 = vpop.f32.mrf.mxu0
    %v285 = vadd.f32 0.0, %v284
    %286 = vmatmul.bf16.gmra.mxu0 %v113
    %v287 = vpop.f32.mrf.mxu0
    %v288 = vadd.f32 0.0, %v287
    %v289 = vpop.f32.mrf.mxu0
    %v290 = vadd.f32 0.0, %v289
    %291 = vmatmul.bf16.gmra.mxu0 %v114
    %v292 = vpop.f32.mrf.mxu0
    %v293 = vadd.f32 0.0, %v292
    %v294 = vpop.f32.mrf.mxu0
    %v295 = vadd.f32 0.0, %v294
    %296 = vmatmul.bf16.gmra.mxu0 %v115
    %v297 = vpop.f32.mrf.mxu0
    %v298 = vadd.f32 0.0, %v297
    %v299 = vpop.f32.mrf.mxu0
    %v300 = vadd.f32 0.0, %v299
    %301 = vdwg.mxu0
    %v302 = vpack.c.bf16 %v263, %v214
    %v303 = vpack.c.bf16 %v265, %v216
    %v304 = vpack.c.bf16 %v268, %v219
    %v305 = vpack.c.bf16 %v270, %v221
    %v306 = vpack.c.bf16 %v273, %v224
    %v307 = vpack.c.bf16 %v275, %v226
    %v308 = vpack.c.bf16 %v278, %v229
    %v309 = vpack.c.bf16 %v280, %v231
    %v310 = vpack.c.bf16 %v283, %v234
    %v311 = vpack.c.bf16 %v285, %v236
    %v312 = vpack.c.bf16 %v288, %v239
    %v313 = vpack.c.bf16 %v290, %v241
    %v314 = vpack.c.bf16 %v293, %v244
    %v315 = vpack.c.bf16 %v295, %v246
    %v316 = vpack.c.bf16 %v298, %v249
    %v317 = vpack.c.bf16 %v300, %v251
    %318 = vst [vmem:[#allocation7] sm:$0xff] %v302
    %319 = vst [vmem:[#allocation7 + $0x8] sm:$0xff] %v303
    %320 = vst [vmem:[#allocation7 + $0x10] sm:$0xff] %v304
    %321 = vst [vmem:[#allocation7 + $0x18] sm:$0xff] %v305
    %322 = vst [vmem:[#allocation7 + $0x20] sm:$0xff] %v306
    %323 = vst [vmem:[#allocation7 + $0x28] sm:$0xff] %v307
    %324 = vst [vmem:[#allocation7 + $0x30] sm:$0xff] %v308
    %325 = vst [vmem:[#allocation7 + $0x38] sm:$0xff] %v309
    %326 = vst [vmem:[#allocation7 + $0x40] sm:$0xff] %v310
    %327 = vst [vmem:[#allocation7 + $0x48] sm:$0xff] %v311
    %328 = vst [vmem:[#allocation7 + $0x50] sm:$0xff] %v312
    %329 = vst [vmem:[#allocation7 + $0x58] sm:$0xff] %v313
    %330 = vst [vmem:[#allocation7 + $0x60] sm:$0xff] %v314
    %331 = vst [vmem:[#allocation7 + $0x68] sm:$0xff] %v315
    %332 = vst [vmem:[#allocation7 + $0x70] sm:$0xff] %v316
    %333 = vst [vmem:[#allocation7 + $0x78] sm:$0xff] %v317
    // Predicated region
    $region18: #{tpu_custom_call.1} parent=1 // pred_check
      _
    $region19: #{tpu_custom_call.1} parent=1 // pred_check_branch
      %335 = sbr.rel (0) target = $region21
    $region20: #{tpu_custom_call.1} parent=1 // pred_region
      %337 = vsyncadd [#allocation4], 0
      %s338 = sshll.u32 [#allocation7], 4
      %s339 = int_to_ptr.vmem [resolvable:$true] %s338
      %s340 = sshll.u32 %s2, 4
      %s341 = int_to_ptr.hbm [resolvable:$true] %s340
      %346 = dma.vmem_to_hbm [thread:$0]  %s339, 2048, %s341, [#allocation4], 128, 128, 8
    $region21: #{tpu_custom_call.1} parent=1 // pred_fallthru
      _
    // Predicated region
    $region22: #{tpu_custom_call.1} parent=1 // pred_check
      _
    $region23: #{tpu_custom_call.1} parent=1 // pred_check_branch
      %348 = sbr.rel (0) target = $region25
    $region24: #{tpu_custom_call.1} parent=1 // pred_region
      %350 = dma.done [#allocation4], 2048
    $region25: #{tpu_custom_call.1} parent=1 // pred_fallthru
      _
    %351 = vsyncpa [#allocation3], 1
    %352 = vsyncpa [#allocation6], 1
    %353 = vsyncpa [#allocation4], 1

</llo_original>
